<compile_context>
chip_gen: v6e
topology: v6e:2x2x1
jax: 0.10.0
libtpu: 0.0.40
codegen_flags: <defaults>
</compile_context>

<pallas_src>
import math
from functools import partial

import jax
import jax.numpy as jnp
from jax.experimental import pallas as pl
from jax.experimental.pallas import tpu as pltpu


def _get_pad(size, multiple):
    new_size = math.ceil(size / multiple) * multiple
    pad_size = new_size - size
    pad_left = pad_size // 2
    pad_right = pad_size - pad_left
    return pad_left, pad_right


def _center_pad_kernel(x_ref, o_ref, *, pad_top, pad_bottom, pad_left, pad_right):
    """Writes one (1, cb, H_out, W_out) output block.

    Interior is stored exactly once; only the border stripes are zero-filled.
    All pad offsets are static Python ints (trace-time constants), so the
    `if` guards below elide zero-sized stores entirely.
    """
    x = x_ref[...]                                   # (1, cb, H, W)
    _, cb, h, w = x.shape
    dt = o_ref.dtype
    w_out = w + pad_left + pad_right

    if pad_top:
        o_ref[:, :, :pad_top, :] = jnp.zeros((1, cb, pad_top, w_out), dt)
    if pad_bottom:
        o_ref[:, :, pad_top + h:, :] = jnp.zeros((1, cb, pad_bottom, w_out), dt)
    if pad_left:
        o_ref[:, :, pad_top:pad_top + h, :pad_left] = jnp.zeros((1, cb, h, pad_left), dt)
    if pad_right:
        o_ref[:, :, pad_top:pad_top + h, pad_left + w:] = jnp.zeros((1, cb, h, pad_right), dt)

    # Single interior store (no double-write of the interior).
    o_ref[:, :, pad_top:pad_top + h, pad_left:pad_left + w] = x.astype(dt)


def _pick_channel_block(c, h, w, h_out, w_out, itemsize, budget_bytes):
    """Largest divisor of c whose double-buffered in+out blocks fit the budget."""
    per_c = 2 * (h * w + h_out * w_out) * itemsize   # in + out, double-buffered
    max_cb = max(1, budget_bytes // per_c)
    cb = 1
    for d in range(1, c + 1):
        if c % d == 0 and d <= max_cb:
            cb = d
    return cb


def center_padding(x, multiple, *, block_vmem_budget_bytes=8 * 1024 * 1024):
    """Pallas implementation of CenterPadding.forward for NCHW inputs."""
    n, c, h, w = x.shape
    pad_top, pad_bottom = _get_pad(h, multiple)
    pad_left, pad_right = _get_pad(w, multiple)
    h_out = h + pad_top + pad_bottom
    w_out = w + pad_left + pad_right

    itemsize = jnp.dtype(x.dtype).itemsize
    cb = _pick_channel_block(c, h, w, h_out, w_out, itemsize, block_vmem_budget_bytes)

    kernel = partial(_center_pad_kernel,
                     pad_top=pad_top, pad_bottom=pad_bottom,
                     pad_left=pad_left, pad_right=pad_right)

    in_bytes = n * c * h * w * itemsize
    out_bytes = n * c * h_out * w_out * itemsize

    return pl.pallas_call(
        kernel,
        out_shape=jax.ShapeDtypeStruct((n, c, h_out, w_out), x.dtype),
        grid=(n, c // cb),
        # Last two block dims equal the full array dims -> no (8,128) issue.
        in_specs=[pl.BlockSpec((1, cb, h, w), lambda i, j: (i, j, 0, 0))],
        out_specs=pl.BlockSpec((1, cb, h_out, w_out), lambda i, j: (i, j, 0, 0)),
        compiler_params=pltpu.CompilerParams(
            dimension_semantics=("parallel", "parallel"),
            vmem_limit_bytes=32 * 1024 * 1024,
        ),
        cost_estimate=pl.CostEstimate(
            flops=0, transcendentals=0, bytes_accessed=in_bytes + out_bytes),
    )(x)


if __name__ == "__main__":
    # CenterPadding has no parameters; only the `multiple` hyperparameter.
    multiple = 14  # DINO patch size — gives nontrivial padding for 16x16 input

    key = jax.random.PRNGKey(0)
    x = jax.random.normal(key, (2, 4, 16, 16), dtype=jnp.float32)

    out = jax.block_until_ready(center_padding(x, multiple))

    # Pure-JAX reference (same semantics as torch.nn.functional.pad with zeros).
    pad_t, pad_b = _get_pad(x.shape[2], multiple)
    pad_l, pad_r = _get_pad(x.shape[3], multiple)
    ref = jnp.pad(x, ((0, 0), (0, 0), (pad_t, pad_b), (pad_l, pad_r)))

    assert out.shape == ref.shape, (out.shape, ref.shape)
    assert out.dtype == ref.dtype, (out.dtype, ref.dtype)
    assert bool(jnp.array_equal(out, ref)), "mismatch vs reference padding"

    print("KERNEL_OK")
</pallas_src>

<mosaic_0001>
module attributes {stable_mosaic.version = 11 : i64} {
  func.func @_center_pad_kernel(%arg0: i32, %arg1: i32, %arg2: memref<1x4x16x16xf32, #tpu.memory_space<vmem>>, %arg3: memref<1x4x28x28xf32, #tpu.memory_space<vmem>>) attributes {dimension_semantics = [#tpu.dimension_semantics<parallel>, #tpu.dimension_semantics<parallel>], iteration_bounds = array<i64: 2, 1>, scalar_prefetch = 0 : i64, scratch_operands = 0 : i64, tpu.core_type = #tpu.core_type<tc>, window_params = [{transform_indices = @transform_0, window_bounds = array<i64: 1, 4, 16, 16>}, {transform_indices = @transform_1, window_bounds = array<i64: 1, 4, 28, 28>}]} {
    %c0 = arith.constant 0 : index
    %c0_0 = arith.constant 0 : index
    %c0_1 = arith.constant 0 : index
    %c0_2 = arith.constant 0 : index
    %0 = vector.load %arg2[%c0, %c0_0, %c0_1, %c0_2] : memref<1x4x16x16xf32, #tpu.memory_space<vmem>>, vector<1x4x16x16xf32>
    %cst = arith.constant 0.000000e+00 : f32
    %1 = vector.broadcast %cst : f32 to vector<1x4x6x28xf32>
    %c0_3 = arith.constant 0 : index
    %c0_4 = arith.constant 0 : index
    %c0_5 = arith.constant 0 : index
    %c0_6 = arith.constant 0 : index
    %2 = vector.load %arg3[%c0_3, %c0_4, %c0_5, %c0_6] : memref<1x4x28x28xf32, #tpu.memory_space<vmem>>, vector<1x4x6x28xf32>
    tpu.vector_store %arg3[%c0_3, %c0_4, %c0_5, %c0_6], %1 {strides = array<i32>} : memref<1x4x28x28xf32, #tpu.memory_space<vmem>>, vector<1x4x6x28xf32>,
    %cst_7 = arith.constant 0.000000e+00 : f32
    %3 = vector.broadcast %cst_7 : f32 to vector<1x4x6x28xf32>
    %c0_8 = arith.constant 0 : index
    %c0_9 = arith.constant 0 : index
    %c22 = arith.constant 22 : index
    %c0_10 = arith.constant 0 : index
    %4 = vector.load %arg3[%c0_8, %c0_9, %c22, %c0_10] : memref<1x4x28x28xf32, #tpu.memory_space<vmem>>, vector<1x4x6x28xf32>
    tpu.vector_store %arg3[%c0_8, %c0_9, %c22, %c0_10], %3 {strides = array<i32>} : memref<1x4x28x28xf32, #tpu.memory_space<vmem>>, vector<1x4x6x28xf32>,
    %cst_11 = arith.constant 0.000000e+00 : f32
    %5 = vector.broadcast %cst_11 : f32 to vector<1x4x16x6xf32>
    %c0_12 = arith.constant 0 : index
    %c0_13 = arith.constant 0 : index
    %c6 = arith.constant 6 : index
    %c0_14 = arith.constant 0 : index
    %6 = vector.load %arg3[%c0_12, %c0_13, %c6, %c0_14] : memref<1x4x28x28xf32, #tpu.memory_space<vmem>>, vector<1x4x16x6xf32>
    tpu.vector_store %arg3[%c0_12, %c0_13, %c6, %c0_14], %5 {strides = array<i32>} : memref<1x4x28x28xf32, #tpu.memory_space<vmem>>, vector<1x4x16x6xf32>,
    %cst_15 = arith.constant 0.000000e+00 : f32
    %7 = vector.broadcast %cst_15 : f32 to vector<1x4x16x6xf32>
    %c0_16 = arith.constant 0 : index
    %c0_17 = arith.constant 0 : index
    %c6_18 = arith.constant 6 : index
    %c22_19 = arith.constant 22 : index
    %8 = vector.load %arg3[%c0_16, %c0_17, %c6_18, %c22_19] : memref<1x4x28x28xf32, #tpu.memory_space<vmem>>, vector<1x4x16x6xf32>
    tpu.vector_store %arg3[%c0_16, %c0_17, %c6_18, %c22_19], %7 {strides = array<i32>} : memref<1x4x28x28xf32, #tpu.memory_space<vmem>>, vector<1x4x16x6xf32>,
    %c0_20 = arith.constant 0 : index
    %c0_21 = arith.constant 0 : index
    %c6_22 = arith.constant 6 : index
    %c6_23 = arith.constant 6 : index
    %9 = vector.load %arg3[%c0_20, %c0_21, %c6_22, %c6_23] : memref<1x4x28x28xf32, #tpu.memory_space<vmem>>, vector<1x4x16x16xf32>
    tpu.vector_store %arg3[%c0_20, %c0_21, %c6_22, %c6_23], %0 {strides = array<i32>} : memref<1x4x28x28xf32, #tpu.memory_space<vmem>>, vector<1x4x16x16xf32>,
    return
  }
  func.func @transform_0(%arg0: i32, %arg1: i32) -> (i32, i32, i32, i32) {
    %c0_i32 = arith.constant 0 : i32
    %c0_i32_0 = arith.constant 0 : i32
    %c0_i32_1 = arith.constant 0 : i32
    return %arg0, %arg1, %c0_i32, %c0_i32_0 : i32, i32, i32, i32
  }
  func.func @transform_1(%arg0: i32, %arg1: i32) -> (i32, i32, i32, i32) {
    %c0_i32 = arith.constant 0 : i32
    %c0_i32_0 = arith.constant 0 : i32
    %c0_i32_1 = arith.constant 0 : i32
    return %arg0, %arg1, %c0_i32, %c0_i32_0 : i32, i32, i32, i32
  }
}

</mosaic_0001>

<llo_original>
// kernel: tpu_custom_call.1
$region0: #{tpu_custom_call.1}
  #allocation0 [shape = 'u32[]', space=smem, size = 0x4, offset = 0x4, fixed_abs, tag = 'smem constant byte address 0x4 - core index']
  #allocation1 [shape = 'u32[144,128]{1,0:T(1,128)}', space=vmem, size = 0x12000, scoped, tag = 'internal scratch']
  %s0 = inlined_call_operand.hbm [shape: f32[2,4,16,16], index: 0, kind: input, shape index: {}]
  %s1 = inlined_call_operand.vmem [shape: f32[2,4,28,28], index: 1, kind: output, shape index: {}]
  %s2 = sld [smem:[#allocation0]]
  $region41: #{tpu_custom_call.1} parent=0
    _
  %s4 = ssub.s32 1, %s2
  %s5 = scalar_select 0, %s4, %s2
  $region1: #{tpu_custom_call.1} parent=0
    #allocation2 [shape = 'u8[65536]{0}', space=vmem, size = 0x10000, scoped, tag = 'input window, operand 0']
    #allocation3 [shape = 's32[2]{0}', space=sflag, size = 0x8, scoped, tag = 'scoped memory for tpu_custom_call.1']
    %6 = vsyncpa [#allocation3], 0
    %s7 = scalar_lea.sflag [#allocation3], 1
    %8 = vsyncpa %s7, 0
    loop: start=0, step=1, limit=4
    $region2: #{tpu_custom_call.1} parent=1 // loop_pre_header
      _
    $region3: #{tpu_custom_call.1} parent=1 // loop_header
      %s10 = sphi 0, %s14
      %p11 = scmp.ge.s32.totalorder %s10, 4
      %s17 = sphi 0, %s29
      %s18 = sphi 0, %s25
      %s19 = sphi 0, %s17
      %s20 = sphi 0, %s18
      %s21 = sphi 0, %s19
      %s22 = sphi 0, %s20
      %s34 = sphi 0, %s36
      %s37 = sphi 0, %s34
      %s38 = sphi 0, %s37
      %s54 = sphi 0, %s38
      %s62 = sphi 0, %s64
      %s65 = sphi 0, %s62
      %s66 = sphi 0, %s65
      %s82 = sphi 0, %s66
    $region4: #{tpu_custom_call.1} parent=1 // loop_header_branch
      %13 = sbr.rel (%p11) target = $region8
    $region5: #{tpu_custom_call.1} parent=1 // loop_body
      %s15 = ssub.s32 %s10, 1
      %s16 = ssub.s32 %s10, 2
      %s23 = sadd.s32 1, %s18
      %p24 = scmp.ge.s32.totalorder %s23, 1
      %s25 = scalar_select %p24, 0, %s23
      %s26 = sadd.s32 1, %s17
      %s27 = scalar_select %p24, %s26, %s17
      %p28 = scmp.ge.s32.totalorder %s27, 2
      %s29 = scalar_select %p28, 0, %s27
      %s30 = ssub.s32 %s17, %s29
      %s31 = ssub.s32 %s18, %s25
      %s32 = sor.u32 %s30, %s31
      %p33 = scmp.eq.s32.totalorder %s32, 0
      %s35 = sadd.s32 %s34, 1
      %s36 = scalar_select %p33, %s34, %s35
      %p39 = pneg %p33
      %p40 = scmp.eq.s32.totalorder %s10, 1
      %p41 = por %p39, %p40
      %p42 = scmp.ne.s32.totalorder %s34, %s37
      %p43 = scmp.eq.s32.totalorder %s10, 0
      %p44 = por %p42, %p43
      %p45 = scmp.ne.s32.totalorder %s34, %s37
      %p46 = scmp.eq.s32.totalorder %s15, 1
      %p47 = por %p45, %p46
      %p48 = scmp.ne.s32.totalorder %s37, %s38
      %p49 = scmp.eq.s32.totalorder %s15, 0
      %p50 = por %p48, %p49
      %p51 = scmp.ne.s32.totalorder %s37, %s38
      %p52 = scmp.eq.s32.totalorder %s16, 1
      %p53 = por %p51, %p52
      %p55 = scmp.ne.s32.totalorder %s38, %s54
      %p56 = scmp.eq.s32.totalorder %s16, 0
      %p57 = por %p55, %p56
      %s58 = ssub.s32 %s17, %s29
      %s59 = ssub.s32 %s18, %s25
      %s60 = sor.u32 %s58, %s59
      %p61 = scmp.eq.s32.totalorder %s60, 0
      %s63 = sadd.s32 %s62, 1
      %s64 = scalar_select %p61, %s62, %s63
      %p67 = pneg %p61
      %p68 = scmp.eq.s32.totalorder %s10, 1
      %p69 = por %p67, %p68
      %p70 = scmp.ne.s32.totalorder %s62, %s65
      %p71 = scmp.eq.s32.totalorder %s10, 0
      %p72 = por %p70, %p71
      %p73 = scmp.ne.s32.totalorder %s62, %s65
      %p74 = scmp.eq.s32.totalorder %s15, 1
      %p75 = por %p73, %p74
      %p76 = scmp.ne.s32.totalorder %s65, %s66
      %p77 = scmp.eq.s32.totalorder %s15, 0
      %p78 = por %p76, %p77
      %p79 = scmp.ne.s32.totalorder %s65, %s66
      %p80 = scmp.eq.s32.totalorder %s16, 1
      %p81 = por %p79, %p80
      %p83 = scmp.ne.s32.totalorder %s66, %s82
      %p84 = scmp.eq.s32.totalorder %s16, 0
      %p85 = por %p83, %p84
      %p86 = scmp.le.s32.totalorder 1, %s10
      %p87 = scmp.lt.s32.totalorder %s10, 3
      %p88 = pnand %p86, %p87
      %p89 = pneg %p88
      // Predicated region
      $region9: #{tpu_custom_call.1} parent=5 // pred_check
        _
      $region10: #{tpu_custom_call.1} parent=5 // pred_check_branch
        %91 = sbr.rel (%p88) target = $region12
      $region11: #{tpu_custom_call.1} parent=5 // pred_region
        %s92 = ssub.s32 %s10, 1
      $region12: #{tpu_custom_call.1} parent=5 // pred_fallthru
        _
      %p93 = scmp.lt.s32.totalorder %s10, 2
      // Predicated region
      $region13: #{tpu_custom_call.1} parent=5 // pred_check
        %p94 = pneg %p93
      $region14: #{tpu_custom_call.1} parent=5 // pred_check_branch
        %96 = sbr.rel (%p94) target = $region16
      $region15: #{tpu_custom_call.1} parent=5 // pred_region
        // Predicated region
        $region17: #{tpu_custom_call.1} parent=15 // pred_check
          %p97 = pneg %p44
        $region18: #{tpu_custom_call.1} parent=15 // pred_check_branch
          %99 = sbr.rel (%p97) target = $region20
        $region19: #{tpu_custom_call.1} parent=15 // pred_region
          %s100 = sand.u32 %s34, 1
          %s101 = scalar_lea.sflag [#allocation3], %s100
          %s102 = sand.u32 %s34, 1
          %s103 = smul.addr %s102, 64
          %s104 = scalar_lea.vmem [#allocation2], %s103
          %s105 = smul.u32 4, %s18
          %s107 = ssub.s32 1024, 1024
          %108 = vsyncadd %s101, %s107
          %s109 = smul.addr %s105, 2
          %s110 = smul.addr %s17, 8
          %s111 = sadd.s32 %s109, %s110
          %s112 = smul.addr %s111, 128
          %s113 = scalar_lea.hbm %s0, %s112
          %s114 = sshll.u32 %s104, 4
          %s115 = int_to_ptr.vmem [resolvable:$true] %s114
          %120 = dma.hbm_to_vmem [thread:$0]  %s113, 1024, %s115, %s101, 128, 128, 8
        $region20: #{tpu_custom_call.1} parent=15 // pred_fallthru
          _
      $region16: #{tpu_custom_call.1} parent=5 // pred_fallthru
        _
      %p121 = scmp.le.s32.totalorder 1, %s10
      %p122 = scmp.lt.s32.totalorder %s10, 3
      %p123 = pnand %p121, %p122
      %p124 = pneg %p123
      // Predicated region
      $region21: #{tpu_custom_call.1} parent=5 // pred_check
        _
      $region22: #{tpu_custom_call.1} parent=5 // pred_check_branch
        %126 = sbr.rel (%p123) target = $region24
      $region23: #{tpu_custom_call.1} parent=5 // pred_region
        %s127 = ssub.s32 %s10, 1
        %s128 = sand.u32 %s37, 1
        %s129 = scalar_lea.sflag [#allocation3], %s128
        %s130 = sand.u32 %s37, 1
        %s131 = smul.addr %s130, 64
        %s132 = scalar_lea.vmem [#allocation2], %s131
        // Predicated region
        $region25: #{tpu_custom_call.1} parent=23 // pred_check
          %p133 = pneg %p50
        $region26: #{tpu_custom_call.1} parent=23 // pred_check_branch
          %135 = sbr.rel (%p133) target = $region28
        $region27: #{tpu_custom_call.1} parent=23 // pred_region
          %136 = dma.done %s129, 1024
        $region28: #{tpu_custom_call.1} parent=23 // pred_fallthru
          _
        %s137 = sand.u32 %s37, 1
        %s138 = scalar_lea.sflag [#allocation3], %s137
        %s139 = sand.u32 %s37, 1
        %s140 = smul.addr %s139, 64
        %s141 = scalar_lea.vmem [#allocation2], %s140
        %p142 = pneg %p50
        %p143 = pneg %p47
        %p144 = pneg %p78
        %p145 = pneg %p75
        %s146 = smul.u32 4, %s20
        %p147 = scmp.lt.s32.totalorder %s19, 1
        %s148 = scalar_select %p147, %s19, 1
        %p149 = scmp.lt.s32.totalorder %s146, 3
        %s150 = scalar_select %p149, %s146, 3
        %s151 = smul.addr %s150, 4
        %s152 = smul.addr %s148, 16
        %s153 = sadd.s32 %s151, %s152
        %s154 = smul.addr %s153, 8
        %s155 = scalar_lea.vmem %s1, %s154
        %s156 = smul.u32 4, %s20
        %s157 = smul.u32 4, %s20
        %p158 = scmp.lt.s32.totalorder %s19, 1
        %s159 = scalar_select %p158, %s19, 1
        %p160 = scmp.lt.s32.totalorder %s157, 3
        %s161 = scalar_select %p160, %s157, 3
        %s162 = smul.addr %s161, 4
        %s163 = smul.addr %s159, 16
        %s164 = sadd.s32 %s162, %s163
        %s165 = smul.addr %s164, 8
        %s166 = scalar_lea.vmem %s1, %s165
        %s167 = smul.u32 4, %s20
        %v168 = vld [vmem:[%s132] sm:$0xff]
        %v169 = vld [vmem:[%s132 + $0x8] sm:$0xff]
        %v170 = vld [vmem:[%s132 + $0x10] sm:$0xff]
        %v171 = vld [vmem:[%s132 + $0x18] sm:$0xff]
        %v172 = vld [vmem:[%s132 + $0x20] sm:$0xff]
        %v173 = vld [vmem:[%s132 + $0x28] sm:$0xff]
        %v174 = vld [vmem:[%s132 + $0x30] sm:$0xff]
        %v175 = vld [vmem:[%s132 + $0x38] sm:$0xff]
        %vm176 = vcmask 226304
        %177 = vst.msk [vmem:[%s166] sm:$0x3f] %vm176, 0.0
        %178 = vst.msk [vmem:[%s166 + $0x20] sm:$0x3f] %vm176, 0.0
        %179 = vst.msk [vmem:[%s166 + $0x40] sm:$0x3f] %vm176, 0.0
        %180 = vst.msk [vmem:[%s166 + $0x60] sm:$0x3f] %vm176, 0.0
        %181 = vst.msk [vmem:[%s166 + $0x16] sm:$0x3f] %vm176, 0.0
        %182 = vst.msk [vmem:[%s166 + $0x36] sm:$0x3f] %vm176, 0.0
        %183 = vst.msk [vmem:[%s166 + $0x56] sm:$0x3f] %vm176, 0.0
        %184 = vst.msk [vmem:[%s166 + $0x76] sm:$0x3f] %vm176, 0.0
        %vm185 = vcmask 48128
        %186 = vst.msk [vmem:[%s166 + $0x6] sm:$0xff] %vm185, 0.0
        %187 = vst.msk [vmem:[%s166 + $0xe] sm:$0xff] %vm185, 0.0
        %188 = vst.msk [vmem:[%s166 + $0x26] sm:$0xff] %vm185, 0.0
        %189 = vst.msk [vmem:[%s166 + $0x2e] sm:$0xff] %vm185, 0.0
        %190 = vst.msk [vmem:[%s166 + $0x46] sm:$0xff] %vm185, 0.0
        %191 = vst.msk [vmem:[%s166 + $0x4e] sm:$0xff] %vm185, 0.0
        %192 = vst.msk [vmem:[%s166 + $0x66] sm:$0xff] %vm185, 0.0
        %193 = vst.msk [vmem:[%s166 + $0x6e] sm:$0xff] %vm185, 0.0
        %vm194 = vcmask 228528
        %195 = vst.msk [vmem:[%s166 + $0x6] sm:$0xff] %vm194, 0.0
        %196 = vst.msk [vmem:[%s166 + $0xe] sm:$0xff] %vm194, 0.0
        %197 = vst.msk [vmem:[%s166 + $0x26] sm:$0xff] %vm194, 0.0
        %198 = vst.msk [vmem:[%s166 + $0x2e] sm:$0xff] %vm194, 0.0
        %199 = vst.msk [vmem:[%s166 + $0x46] sm:$0xff] %vm194, 0.0
        %200 = vst.msk [vmem:[%s166 + $0x4e] sm:$0xff] %vm194, 0.0
        %201 = vst.msk [vmem:[%s166 + $0x66] sm:$0xff] %vm194, 0.0
        %202 = vst.msk [vmem:[%s166 + $0x6e] sm:$0xff] %vm194, 0.0
        %211 = vrot.lane.b32.xlu0 %v168, 6
        %v212 = vpop.permute.xlu0 %211
        %213 = vrot.lane.b32.xlu0 %v169, 6
        %v214 = vpop.permute.xlu0 %213
        %215 = vrot.lane.b32.xlu0 %v170, 6
        %v216 = vpop.permute.xlu0 %215
        %217 = vrot.lane.b32.xlu0 %v171, 6
        %v218 = vpop.permute.xlu0 %217
        %219 = vrot.lane.b32.xlu0 %v172, 6
        %v220 = vpop.permute.xlu0 %219
        %221 = vrot.lane.b32.xlu0 %v173, 6
        %v222 = vpop.permute.xlu0 %221
        %223 = vrot.lane.b32.xlu0 %v174, 6
        %v224 = vpop.permute.xlu0 %223
        %225 = vrot.lane.b32.xlu0 %v175, 6
        %v226 = vpop.permute.xlu0 %225
        %vm235 = vcmask 179248
        %236 = vst.msk [vmem:[%s166 + $0x6] sm:$0xff] %vm235, %v212
        %237 = vst.msk [vmem:[%s166 + $0xe] sm:$0xff] %vm235, %v214
        %238 = vst.msk [vmem:[%s166 + $0x26] sm:$0xff] %vm235, %v216
        %239 = vst.msk [vmem:[%s166 + $0x2e] sm:$0xff] %vm235, %v218
        %240 = vst.msk [vmem:[%s166 + $0x46] sm:$0xff] %vm235, %v220
        %241 = vst.msk [vmem:[%s166 + $0x4e] sm:$0xff] %vm235, %v222
        %242 = vst.msk [vmem:[%s166 + $0x66] sm:$0xff] %vm235, %v224
        %243 = vst.msk [vmem:[%s166 + $0x6e] sm:$0xff] %vm235, %v226
        %s244 = smul.u32 4, %s20
        %p245 = scmp.lt.s32.totalorder %s19, 1
        %s246 = scalar_select %p245, %s19, 1
        %p247 = scmp.lt.s32.totalorder %s244, 3
        %s248 = scalar_select %p247, %s244, 3
        %s249 = smul.addr %s248, 4
        %s250 = smul.addr %s246, 16
        %s251 = sadd.s32 %s249, %s250
        %s252 = smul.addr %s251, 8
        %s253 = scalar_lea.vmem %s1, %s252
        // Predicated region
        $region29: #{tpu_custom_call.1} parent=23 // pred_check
          %p254 = pneg %p75
        $region30: #{tpu_custom_call.1} parent=23 // pred_check_branch
          %256 = sbr.rel (%p254) target = $region32
        $region31: #{tpu_custom_call.1} parent=23 // pred_region
          %s257 = smul.u32 4, %s20
        $region32: #{tpu_custom_call.1} parent=23 // pred_fallthru
          _
      $region24: #{tpu_custom_call.1} parent=5 // pred_fallthru
        _
      %p258 = scmp.le.s32.totalorder 2, %s10
      // Predicated region
      $region33: #{tpu_custom_call.1} parent=5 // pred_check
        %p259 = pneg %p258
      $region34: #{tpu_custom_call.1} parent=5 // pred_check_branch
        %261 = sbr.rel (%p259) target = $region36
      $region35: #{tpu_custom_call.1} parent=5 // pred_region
        %s262 = ssub.s32 %s10, 2
        // Predicated region
        $region37: #{tpu_custom_call.1} parent=35 // pred_check
          %p263 = pneg %p81
        $region38: #{tpu_custom_call.1} parent=35 // pred_check_branch
          %265 = sbr.rel (%p263) target = $region40
        $region39: #{tpu_custom_call.1} parent=35 // pred_region
          %s266 = smul.u32 4, %s22
          %p267 = scmp.lt.s32.totalorder %s21, 1
          %s268 = scalar_select %p267, %s21, 1
          %p269 = scmp.lt.s32.totalorder %s266, 3
          %s270 = scalar_select %p269, %s266, 3
          %s271 = smul.addr %s270, 4
          %s272 = smul.addr %s268, 16
          %s273 = sadd.s32 %s271, %s272
          %s274 = smul.addr %s273, 8
          %s275 = scalar_lea.vmem %s1, %s274
        $region40: #{tpu_custom_call.1} parent=35 // pred_fallthru
          _
      $region36: #{tpu_custom_call.1} parent=5 // pred_fallthru
        _
    $region6: #{tpu_custom_call.1} parent=1 // loop_footer
      %s14 = sadd.s32 1, %s10
    $region7: #{tpu_custom_call.1} parent=1 // loop_footer_branch
      %9 = sbr.rel target = $region3
    $region8: #{tpu_custom_call.1} parent=1 // loop_exit
      _
    %276 = vsyncpa [#allocation3], 1
    %s277 = scalar_lea.sflag [#allocation3], 1
    %278 = vsyncpa %s277, 1

</llo_original>
